<compile_context>
chip_gen: v7x
topology: tpu7x:2x2x1
jax: 0.10.0
libtpu: 0.0.40
codegen_flags: <defaults>
</compile_context>

<pallas_src>
import math
from functools import partial

import jax
import jax.numpy as jnp
import numpy as np
from jax.experimental import pallas as pl
from jax.experimental.pallas import tpu as pltpu


def _round_up(a, b):
    return (a + b - 1) // b * b


def _encoder_layer_kernel(x_ref, xh_ref, w1_ref, cw_ref, w2_ref, b2_ref, gamma_ref,
                          beta_ref, o_ref, h_ref, acc_ref, *,
                          batch_rows, kernel_size, keep_col, e_real, ln_eps, mm_dtype,
                          has_mask):
    """One row-tile of the fused encoder layer.

    x_ref  : (tile_rows, E_pad)  f32   this block's rows of the augmented input
    xh_ref : (halo_rows, E_pad)  f32   previous (K-1) time steps (causal halo, recomputed)
    w1_ref : (E_pad, C_pad)  mm_dtype  linear1 weight with b1 folded into row `keep_col`
    cw_ref : (K_pad, C_pad)  f32       softmaxed conv taps, row d = weight for time-lag d
    w2_ref : (C_pad, E_pad)  mm_dtype  linear2 weight
    b2_ref / gamma_ref / beta_ref : (1, E_pad) f32
    o_ref  : (tile_rows, E_pad)  f32
    h_ref  : (halo_rows + tile_rows, C_pad) f32 VMEM scratch (linear1 output incl. halo)
    acc_ref: (tile_rows, C_pad) f32 VMEM scratch (conv accumulator)
    """
    tile_rows = x_ref.shape[0]
    halo_rows = xh_ref.shape[0]

    w1 = w1_ref[...]

    # --- linear1 over the causal halo (recomputed so grid blocks stay independent).
    #     Block 0 has no real halo -> zero fill (causal left zero-padding), matmul skipped.
    @pl.when(pl.program_id(0) == 0)
    def _():
        h_ref[pl.ds(0, halo_rows), :] = jnp.zeros((halo_rows, h_ref.shape[1]), jnp.float32)

    @pl.when(pl.program_id(0) > 0)
    def _():
        xh = xh_ref[...]
        hh = jnp.dot(xh.astype(mm_dtype), w1, preferred_element_type=jnp.float32)
        if has_mask:
            hh = xh[:, keep_col:keep_col + 1] * hh
        h_ref[pl.ds(0, halo_rows), :] = hh

    # --- linear1 over this block.  The keep column of the augmented x scales the folded
    #     bias row of w1 (keep * b1) and, when a padding mask exists, is multiplied back
    #     in to realise masked_fill(pad, 0):   h = keep * (x @ w1 + b1).
    x = x_ref[...]
    h = jnp.dot(x.astype(mm_dtype), w1, preferred_element_type=jnp.float32)
    if has_mask:
        h = x[:, keep_col:keep_col + 1] * h
    h_ref[pl.ds(halo_rows, tile_rows), :] = h

    # --- lightweight causal depthwise conv:  out[t] = sum_d cw[d] * h[t - d]
    #     A lag of d time steps is a (sublane-aligned) shift of d*batch_rows rows.
    #     Taps are combined pairwise to halve read-modify-writes of the accumulator.
    cw = cw_ref[...]                                            # (K_pad, C_pad)
    acc_ref[...] = h_ref[pl.ds(halo_rows, tile_rows), :] * cw[0:1, :]
    d = 1
    while d < kernel_size:
        off = halo_rows - d * batch_rows                        # static, multiple of 8
        part = h_ref[pl.ds(off, tile_rows), :] * cw[d:d + 1, :]
        if d + 1 < kernel_size:
            off2 = halo_rows - (d + 1) * batch_rows
            part = part + h_ref[pl.ds(off2, tile_rows), :] * cw[d + 1:d + 2, :]
            d += 2
        else:
            d += 1
        acc_ref[...] += part

    # --- linear2 + bias, residual add (residual = original x, with the keep column zeroed
    #     so it does not pollute the LayerNorm statistics).
    y = jnp.dot(acc_ref[...].astype(mm_dtype), w2_ref[...],
                preferred_element_type=jnp.float32) + b2_ref[...]
    col = jax.lax.broadcasted_iota(jnp.int32, (1, x.shape[1]), 1)
    residual = jnp.where(col == keep_col, 0.0, x)
    y = y + residual

    # --- post LayerNorm over the e_real real columns (padded columns of y are exactly 0),
    #     one-pass statistics: var = E[y^2] - mean^2.
    inv_e = 1.0 / e_real
    mean = jnp.sum(y, axis=-1, keepdims=True) * inv_e
    var = jnp.sum(y * y, axis=-1, keepdims=True) * inv_e - mean * mean
    y = (y - mean) * jax.lax.rsqrt(var + ln_eps)
    o_ref[...] = (y * gamma_ref[...] + beta_ref[...]).astype(o_ref.dtype)


def _choose_tile_t(T, B_pad, E_pad, C_pad, K, budget_bytes=12 * 1024 * 1024):
    """Pick a time-tile so the per-block VMEM working set stays under `budget_bytes`
    (leaves ample headroom below v7x's 64 MiB physical VMEM / the 48 MiB limit we request)."""
    step = max(K - 1, 1)
    halo_rows = step * B_pad
    weights = 2 * E_pad * C_pad * 2 + (_round_up(K, 8) + 3) * max(E_pad, C_pad) * 4
    fixed = 2 * halo_rows * E_pad * 4 + halo_rows * C_pad * 4 + weights
    per_row = 16 * E_pad + 8 * C_pad      # 2x dbuf f32 in + 2x dbuf f32 out + h + acc scratch
    rows = max(halo_rows, (budget_bytes - fixed) // per_row)
    tile_t = max(step, (rows // B_pad) // step * step)
    return min(tile_t, _round_up(T, step))


def light_conv_encoder_layer(x, encoder_padding_mask, params, *, num_heads, kernel_size,
                             tile_t=None, mm_dtype=jnp.bfloat16,
                             vmem_limit_bytes=48 * 1024 * 1024, ln_eps=1e-5,
                             interpret=False):
    """x: (T, B, E) f32; encoder_padding_mask: (B, T) bool or None.
    Returns (out (T, B, E), None) just like the PyTorch module."""
    T, B, E = x.shape
    C = params["w1"].shape[1]
    K = kernel_size
    H = num_heads
    assert C % H == 0

    LANE, SUB = 128, 8
    f32 = jnp.float32
    B_pad = _round_up(B, SUB)
    E_pad = _round_up(E + 1, LANE)          # +1 for the folded keep/bias column
    C_pad = _round_up(C, LANE)
    keep_col = E
    step = max(K - 1, 1)
    has_mask = encoder_padding_mask is not None

    if tile_t is None:
        tile_t = _choose_tile_t(T, B_pad, E_pad, C_pad, K)
    tile_t = max(step, (tile_t // step) * step)   # multiple of (K-1) so the halo block divides a tile
    T_pad = _round_up(T, tile_t)
    grid = (T_pad // tile_t,)
    tile_rows = tile_t * B_pad
    halo_rows = step * B_pad
    n_pad = T_pad * B_pad
    s = tile_rows // halo_rows

    x = x.astype(f32)
    if has_mask:
        keep = 1.0 - encoder_padding_mask.astype(f32).T          # (T, B): 1 = keep, 0 = pad
    else:
        keep = jnp.ones((T, B), f32)

    # Augmented, lane/sublane-padded, time-major input:
    #   cols [0, E): original x   |   col keep_col: keep mask   |   remaining cols: 0
    xa = jnp.zeros((T_pad, B_pad, E_pad), f32)
    xa = xa.at[:T, :B, :E].set(x)
    xa = xa.at[:T, :B, keep_col].set(keep)
    x2 = xa.reshape(n_pad, E_pad)

    # Weights: lane-pad; fold b1 into w1 row `keep_col`; MXU weights in mm_dtype.
    w1a = jnp.zeros((E_pad, C_pad), f32)
    w1a = w1a.at[:E, :C].set(params["w1"]).at[keep_col, :C].set(params["b1"])
    w1a = w1a.astype(mm_dtype)
    w2p = jnp.zeros((C_pad, E_pad), f32).at[:C, :E].set(params["w2"]).astype(mm_dtype)
    b2p = jnp.zeros((1, E_pad), f32).at[0, :E].set(params["b2"])
    gmp = jnp.zeros((1, E_pad), f32).at[0, :E].set(params["gamma"])
    btp = jnp.zeros((1, E_pad), f32).at[0, :E].set(params["beta"])

    # Conv taps: softmax over K per head, repeated over the channels of each head,
    # reordered so row d is the weight for time-lag d (host-side; kernel only multiplies).
    w_soft = jax.nn.softmax(params["conv_weight"].astype(f32), axis=-1)     # (H, K)
    wc_lag = jnp.repeat(w_soft, C // H, axis=0).T[::-1, :]                  # (K, C)
    k_pad = _round_up(K, SUB)
    cwp = jnp.zeros((k_pad, C_pad), f32).at[:K, :C].set(wc_lag)

    kernel = partial(_encoder_layer_kernel, batch_rows=B_pad, kernel_size=K,
                     keep_col=keep_col, e_real=float(E), ln_eps=ln_eps, mm_dtype=mm_dtype,
                     has_mask=has_mask)

    idx_tile = lambda i: (i, 0)
    idx_halo = lambda i: (jnp.maximum(i * s - 1, 0), 0)   # last (K-1) steps of the previous tile
    idx_const = lambda i: (0, 0)

    flops = (2 * (n_pad + (grid[0] - 1) * halo_rows) * E_pad * C_pad   # linear1 (+ halo recompute)
             + 2 * K * n_pad * C_pad                                   # conv
             + 2 * n_pad * C_pad * E_pad                               # linear2
             + 10 * n_pad * E_pad)                                     # residual + layer norm
    bytes_accessed = (2 * n_pad * E_pad * 4 + n_pad * E_pad * 4
                      + 2 * E_pad * C_pad * 2 + (k_pad + 3) * max(E_pad, C_pad) * 4)

    out2 = pl.pallas_call(
        kernel,
        out_shape=jax.ShapeDtypeStruct((n_pad, E_pad), f32),
        grid_spec=pltpu.PrefetchScalarGridSpec(
            num_scalar_prefetch=0,
            grid=grid,
            in_specs=[
                pl.BlockSpec((tile_rows, E_pad), idx_tile),    # x, this block
                pl.BlockSpec((halo_rows, E_pad), idx_halo),    # x, causal halo view
                pl.BlockSpec((E_pad, C_pad), idx_const),       # w1 (+ folded b1)
                pl.BlockSpec((k_pad, C_pad), idx_const),       # softmaxed conv taps
                pl.BlockSpec((C_pad, E_pad), idx_const),       # w2
                pl.BlockSpec((1, E_pad), idx_const),           # b2
                pl.BlockSpec((1, E_pad), idx_const),           # gamma
                pl.BlockSpec((1, E_pad), idx_const),           # beta
            ],
            out_specs=pl.BlockSpec((tile_rows, E_pad), idx_tile),
            scratch_shapes=[
                pltpu.VMEM((halo_rows + tile_rows, C_pad), f32),   # linear1 output (halo + tile)
                pltpu.VMEM((tile_rows, C_pad), f32),               # conv accumulator
            ],
        ),
        compiler_params=pltpu.CompilerParams(
            dimension_semantics=("parallel",),
            vmem_limit_bytes=vmem_limit_bytes,
        ),
        cost_estimate=pl.CostEstimate(flops=int(flops), transcendentals=int(n_pad),
                                      bytes_accessed=int(bytes_accessed)),
        interpret=interpret,
    )(x2, x2, w1a, cwp, w2p, b2p, gmp, btp)

    out = out2.reshape(T_pad, B_pad, E_pad)[:T, :B, :E]
    return out, None


def reference_forward(x, encoder_padding_mask, params, *, num_heads, kernel_size,
                      mm_dtype=jnp.float32, ln_eps=1e-5):
    """Pure-JAX reference mirroring the PyTorch module (eval mode).  `mm_dtype=bfloat16`
    mirrors the kernel's matmul-input quantization (f32 accumulation) for tight checks."""
    T, B, E = x.shape
    f32 = jnp.float32
    q = lambda a: a.astype(mm_dtype).astype(f32)
    residual = x
    h = q(x) @ q(params["w1"]) + q(params["b1"])
    if encoder_padding_mask is not None:
        h = jnp.where(encoder_padding_mask.T[:, :, None], 0.0, h)
    w = jax.nn.softmax(params["conv_weight"], axis=-1)           # (H, K)
    C = h.shape[-1]
    wc = jnp.repeat(w, C // num_heads, axis=0)                   # (C, K)
    K = kernel_size
    out = jnp.zeros_like(h)
    for d in range(K):
        shifted = jnp.pad(h, ((d, 0), (0, 0), (0, 0)))[:T]
        out = out + shifted * wc[:, K - 1 - d][None, None, :]
    y = q(out) @ q(params["w2"]) + params["b2"]
    y = residual + y
    mean = y.mean(-1, keepdims=True)
    var = ((y - mean) ** 2).mean(-1, keepdims=True)
    return (y - mean) / jnp.sqrt(var + ln_eps) * params["gamma"] + params["beta"]


def init_params(key, embed_dim, conv_dim, num_heads, kernel_size):
    ks = jax.random.split(key, 7)
    b1b = math.sqrt(6.0 / (embed_dim + conv_dim))
    w1 = jax.random.uniform(ks[0], (embed_dim, conv_dim), jnp.float32, -b1b, b1b)
    b2b = math.sqrt(6.0 / (conv_dim + embed_dim))
    w2 = jax.random.uniform(ks[1], (conv_dim, embed_dim), jnp.float32, -b2b, b2b)
    bw = math.sqrt(6.0 / (kernel_size + num_heads))
    conv_weight = jax.random.uniform(ks[2], (num_heads, kernel_size), jnp.float32, -bw, bw)
    # The module zero-initializes biases (and gamma=1, beta=0); use small random values so
    # the bias-folding / affine paths are actually exercised (trained weights are nonzero).
    return {
        "w1": w1, "b1": 0.1 * jax.random.normal(ks[3], (conv_dim,), jnp.float32),
        "conv_weight": conv_weight,
        "w2": w2, "b2": 0.1 * jax.random.normal(ks[4], (embed_dim,), jnp.float32),
        "gamma": 1.0 + 0.1 * jax.random.normal(ks[5], (embed_dim,), jnp.float32),
        "beta": 0.1 * jax.random.normal(ks[6], (embed_dim,), jnp.float32),
    }


if __name__ == "__main__":
    T, B = 8, 2                     # seq_len, batch
    embed_dim, conv_dim = 32, 32
    num_heads, kernel_size = 4, 3

    key = jax.random.PRNGKey(0)
    kp, kx = jax.random.split(key)
    params = init_params(kp, embed_dim, conv_dim, num_heads, kernel_size)
    x = jax.random.normal(kx, (T, B, embed_dim), jnp.float32)
    # Pad the last 2 time steps of batch element 1.
    encoder_padding_mask = jnp.zeros((B, T), dtype=bool).at[1, T - 2:].set(True)

    # (a) small explicit time-tile so the grid has several blocks and the halo path is used
    out_a, attn = light_conv_encoder_layer(
        x, encoder_padding_mask, params,
        num_heads=num_heads, kernel_size=kernel_size, tile_t=2)
    out_a = jax.block_until_ready(out_a)

    # (b) auto-chosen tile, no padding mask (exercises the mask-free fast path)
    out_b, _ = light_conv_encoder_layer(
        x, None, params, num_heads=num_heads, kernel_size=kernel_size)
    out_b = jax.block_until_ready(out_b)

    ref_a_q = reference_forward(x, encoder_padding_mask, params, num_heads=num_heads,
                                kernel_size=kernel_size, mm_dtype=jnp.bfloat16)
    ref_a_f = reference_forward(x, encoder_padding_mask, params, num_heads=num_heads,
                                kernel_size=kernel_size, mm_dtype=jnp.float32)
    ref_b_q = reference_forward(x, None, params, num_heads=num_heads,
                                kernel_size=kernel_size, mm_dtype=jnp.bfloat16)

    assert out_a.shape == (T, B, embed_dim) and attn is None
    # tight check vs. a reference with matched bf16 matmul quantization
    np.testing.assert_allclose(np.asarray(out_a), np.asarray(ref_a_q), rtol=1e-3, atol=1e-3)
    np.testing.assert_allclose(np.asarray(out_b), np.asarray(ref_b_q), rtol=1e-3, atol=1e-3)
    # sanity check vs. the pure-f32 module semantics (bf16 MXU quantization error only)
    np.testing.assert_allclose(np.asarray(out_a), np.asarray(ref_a_f), rtol=5e-2, atol=5e-2)
    print("KERNEL_OK")
</pallas_src>

<mosaic_0001>
module attributes {stable_mosaic.version = 11 : i64} {
  func.func @_encoder_layer_kernel(%arg0: i32, %arg1: memref<16x128xf32, #tpu.memory_space<vmem>>, %arg2: memref<16x128xf32, #tpu.memory_space<vmem>>, %arg3: memref<128x128xbf16, #tpu.memory_space<vmem>>, %arg4: memref<8x128xf32, #tpu.memory_space<vmem>>, %arg5: memref<128x128xbf16, #tpu.memory_space<vmem>>, %arg6: memref<1x128xf32, #tpu.memory_space<vmem>>, %arg7: memref<1x128xf32, #tpu.memory_space<vmem>>, %arg8: memref<1x128xf32, #tpu.memory_space<vmem>>, %arg9: memref<16x128xf32, #tpu.memory_space<vmem>>, %arg10: memref<32x128xf32, #tpu.memory_space<vmem>>, %arg11: memref<16x128xf32, #tpu.memory_space<vmem>>) attributes {dimension_semantics = [#tpu.dimension_semantics<parallel>], iteration_bounds = array<i64: 4>, scalar_prefetch = 0 : i64, scratch_operands = 2 : i64, tpu.core_type = #tpu.core_type<tc>, window_params = [{transform_indices = @transform_0, window_bounds = array<i64: 16, 128>}, {transform_indices = @transform_1, window_bounds = array<i64: 16, 128>}, {pipeline_mode = #tpu.pipeline_mode<synchronous>, transform_indices = @transform_2, window_bounds = array<i64: 128, 128>}, {pipeline_mode = #tpu.pipeline_mode<synchronous>, transform_indices = @transform_3, window_bounds = array<i64: 8, 128>}, {pipeline_mode = #tpu.pipeline_mode<synchronous>, transform_indices = @transform_4, window_bounds = array<i64: 128, 128>}, {pipeline_mode = #tpu.pipeline_mode<synchronous>, transform_indices = @transform_5, window_bounds = array<i64: 1, 128>}, {pipeline_mode = #tpu.pipeline_mode<synchronous>, transform_indices = @transform_6, window_bounds = array<i64: 1, 128>}, {pipeline_mode = #tpu.pipeline_mode<synchronous>, transform_indices = @transform_7, window_bounds = array<i64: 1, 128>}, {transform_indices = @transform_8, window_bounds = array<i64: 16, 128>}]} {
    %c0 = arith.constant 0 : index
    %c0_0 = arith.constant 0 : index
    %0 = vector.load %arg3[%c0, %c0_0] : memref<128x128xbf16, #tpu.memory_space<vmem>>, vector<128x128xbf16>
    %c0_i32 = arith.constant 0 : i32
    %1 = arith.cmpi eq, %arg0, %c0_i32 : i32
    %2 = arith.extui %1 : i1 to i32
    %c0_i32_1 = arith.constant 0 : i32
    %3 = arith.cmpi ne, %2, %c0_i32_1 : i32
    scf.if %3 {
      %cst_39 = arith.constant 0.000000e+00 : f32
      %72 = vector.broadcast %cst_39 : f32 to vector<16x128xf32>
      %c0_40 = arith.constant 0 : index
      %c0_41 = arith.constant 0 : index
      %73 = vector.load %arg10[%c0_40, %c0_41] : memref<32x128xf32, #tpu.memory_space<vmem>>, vector<16x128xf32>
      tpu.vector_store %arg10[%c0_40, %c0_41], %72 {strides = array<i32>} : memref<32x128xf32, #tpu.memory_space<vmem>>, vector<16x128xf32>,
    } else {
    }
    %c0_i32_2 = arith.constant 0 : i32
    %4 = arith.cmpi sgt, %arg0, %c0_i32_2 : i32
    %5 = arith.extui %4 : i1 to i32
    %c0_i32_3 = arith.constant 0 : i32
    %6 = arith.cmpi ne, %5, %c0_i32_3 : i32
    scf.if %6 {
      %c0_39 = arith.constant 0 : index
      %c0_40 = arith.constant 0 : index
      %72 = vector.load %arg2[%c0_39, %c0_40] : memref<16x128xf32, #tpu.memory_space<vmem>>, vector<16x128xf32>
      %73 = arith.truncf %72 : vector<16x128xf32> to vector<16x128xbf16>
      %cst_41 = arith.constant dense<0.000000e+00> : vector<16x128xf32>
      %74 = tpu.matmul %73, %0, %cst_41 {dimension_numbers = #tpu.dot_dimension_numbers<[1], [0], [0], [1], [0, 0, 1, 1], [], []>} : vector<16x128xbf16>, vector<128x128xbf16>, vector<16x128xf32> -> vector<16x128xf32>
      %75 = vector.extract_strided_slice %72 {offsets = [0, 32], sizes = [16, 1], strides = [1, 1]} : vector<16x128xf32> to vector<16x1xf32>
      %76 = vector.broadcast %75 : vector<16x1xf32> to vector<16x128xf32>
      %77 = arith.mulf %76, %74 : vector<16x128xf32>
      %c0_42 = arith.constant 0 : index
      %c0_43 = arith.constant 0 : index
      %78 = vector.load %arg10[%c0_42, %c0_43] : memref<32x128xf32, #tpu.memory_space<vmem>>, vector<16x128xf32>
      tpu.vector_store %arg10[%c0_42, %c0_43], %77 {strides = array<i32>} : memref<32x128xf32, #tpu.memory_space<vmem>>, vector<16x128xf32>,
    } else {
    }
    %c0_4 = arith.constant 0 : index
    %c0_5 = arith.constant 0 : index
    %7 = vector.load %arg1[%c0_4, %c0_5] : memref<16x128xf32, #tpu.memory_space<vmem>>, vector<16x128xf32>
    %8 = arith.truncf %7 : vector<16x128xf32> to vector<16x128xbf16>
    %cst = arith.constant dense<0.000000e+00> : vector<16x128xf32>
    %9 = tpu.matmul %8, %0, %cst {dimension_numbers = #tpu.dot_dimension_numbers<[1], [0], [0], [1], [0, 0, 1, 1], [], []>} : vector<16x128xbf16>, vector<128x128xbf16>, vector<16x128xf32> -> vector<16x128xf32>
    %10 = vector.extract_strided_slice %7 {offsets = [0, 32], sizes = [16, 1], strides = [1, 1]} : vector<16x128xf32> to vector<16x1xf32>
    %11 = vector.broadcast %10 : vector<16x1xf32> to vector<16x128xf32>
    %12 = arith.mulf %11, %9 : vector<16x128xf32>
    %c16 = arith.constant 16 : index
    %c0_6 = arith.constant 0 : index
    %13 = vector.load %arg10[%c16, %c0_6] : memref<32x128xf32, #tpu.memory_space<vmem>>, vector<16x128xf32>
    tpu.vector_store %arg10[%c16, %c0_6], %12 {strides = array<i32>} : memref<32x128xf32, #tpu.memory_space<vmem>>, vector<16x128xf32>,
    %c0_7 = arith.constant 0 : index
    %c0_8 = arith.constant 0 : index
    %14 = vector.load %arg4[%c0_7, %c0_8] : memref<8x128xf32, #tpu.memory_space<vmem>>, vector<8x128xf32>
    %c16_9 = arith.constant 16 : index
    %c0_10 = arith.constant 0 : index
    %15 = vector.load %arg10[%c16_9, %c0_10] : memref<32x128xf32, #tpu.memory_space<vmem>>, vector<16x128xf32>
    %16 = vector.extract_strided_slice %14 {offsets = [0, 0], sizes = [1, 128], strides = [1, 1]} : vector<8x128xf32> to vector<1x128xf32>
    %17 = vector.broadcast %16 : vector<1x128xf32> to vector<16x128xf32>
    %18 = arith.mulf %15, %17 : vector<16x128xf32>
    %c0_11 = arith.constant 0 : index
    %c0_12 = arith.constant 0 : index
    %19 = vector.load %arg11[%c0_11, %c0_12] : memref<16x128xf32, #tpu.memory_space<vmem>>, vector<16x128xf32>
    tpu.vector_store %arg11[%c0_11, %c0_12], %18 {strides = array<i32>} : memref<16x128xf32, #tpu.memory_space<vmem>>, vector<16x128xf32>,
    %c8 = arith.constant 8 : index
    %c0_13 = arith.constant 0 : index
    %20 = vector.load %arg10[%c8, %c0_13] : memref<32x128xf32, #tpu.memory_space<vmem>>, vector<16x128xf32>
    %21 = vector.extract_strided_slice %14 {offsets = [1, 0], sizes = [1, 128], strides = [1, 1]} : vector<8x128xf32> to vector<1x128xf32>
    %22 = vector.broadcast %21 : vector<1x128xf32> to vector<16x128xf32>
    %23 = arith.mulf %20, %22 : vector<16x128xf32>
    %c0_14 = arith.constant 0 : index
    %c0_15 = arith.constant 0 : index
    %24 = vector.load %arg10[%c0_14, %c0_15] : memref<32x128xf32, #tpu.memory_space<vmem>>, vector<16x128xf32>
    %25 = vector.extract_strided_slice %14 {offsets = [2, 0], sizes = [1, 128], strides = [1, 1]} : vector<8x128xf32> to vector<1x128xf32>
    %26 = vector.broadcast %25 : vector<1x128xf32> to vector<16x128xf32>
    %27 = arith.mulf %24, %26 : vector<16x128xf32>
    %28 = arith.addf %23, %27 : vector<16x128xf32>
    %c0_16 = arith.constant 0 : index
    %c0_17 = arith.constant 0 : index
    %29 = vector.load %arg11[%c0_16, %c0_17] : memref<16x128xf32, #tpu.memory_space<vmem>>, vector<16x128xf32>
    %30 = arith.addf %29, %28 : vector<16x128xf32>
    %c0_18 = arith.constant 0 : index
    %c0_19 = arith.constant 0 : index
    %31 = vector.load %arg11[%c0_18, %c0_19] : memref<16x128xf32, #tpu.memory_space<vmem>>, vector<16x128xf32>
    tpu.vector_store %arg11[%c0_18, %c0_19], %30 {strides = array<i32>} : memref<16x128xf32, #tpu.memory_space<vmem>>, vector<16x128xf32>,
    %c0_20 = arith.constant 0 : index
    %c0_21 = arith.constant 0 : index
    %32 = vector.load %arg11[%c0_20, %c0_21] : memref<16x128xf32, #tpu.memory_space<vmem>>, vector<16x128xf32>
    %33 = arith.truncf %32 : vector<16x128xf32> to vector<16x128xbf16>
    %c0_22 = arith.constant 0 : index
    %c0_23 = arith.constant 0 : index
    %34 = vector.load %arg5[%c0_22, %c0_23] : memref<128x128xbf16, #tpu.memory_space<vmem>>, vector<128x128xbf16>
    %cst_24 = arith.constant dense<0.000000e+00> : vector<16x128xf32>
    %35 = tpu.matmul %33, %34, %cst_24 {dimension_numbers = #tpu.dot_dimension_numbers<[1], [0], [0], [1], [0, 0, 1, 1], [], []>} : vector<16x128xbf16>, vector<128x128xbf16>, vector<16x128xf32> -> vector<16x128xf32>
    %c0_25 = arith.constant 0 : index
    %c0_26 = arith.constant 0 : index
    %36 = vector.load %arg6[%c0_25, %c0_26] : memref<1x128xf32, #tpu.memory_space<vmem>>, vector<1x128xf32>
    %37 = vector.broadcast %36 : vector<1x128xf32> to vector<16x128xf32>
    %38 = arith.addf %35, %37 : vector<16x128xf32>
    %39 = tpu.iota {dimensions = array<i32: 1>} : vector<1x128xi32>
    %c32_i32 = arith.constant 32 : i32
    %40 = vector.broadcast %c32_i32 : i32 to vector<1x128xi32>
    %41 = arith.cmpi eq, %39, %40 : vector<1x128xi32>
    %cst_27 = arith.constant 0.000000e+00 : f32
    %42 = vector.shape_cast %41 : vector<1x128xi1> to vector<1x128xi1>
    %43 = vector.broadcast %42 : vector<1x128xi1> to vector<16x128xi1>
    %44 = vector.broadcast %cst_27 : f32 to vector<16x128xf32>
    %45 = arith.select %43, %44, %7 : vector<16x128xi1>, vector<16x128xf32>
    %46 = arith.addf %38, %45 : vector<16x128xf32>
    %cst_28 = arith.constant dense<0.000000e+00> : vector<16xf32>
    %47 = vector.multi_reduction <add>, %46, %cst_28 [1] : vector<16x128xf32> to vector<16xf32>
    %48 = vector.shape_cast %47 : vector<16xf32> to vector<16x1xf32>
    %cst_29 = arith.constant 3.125000e-02 : f32
    %49 = vector.broadcast %cst_29 : f32 to vector<16x1xf32>
    %50 = arith.mulf %48, %49 : vector<16x1xf32>
    %51 = arith.mulf %46, %46 : vector<16x128xf32>
    %cst_30 = arith.constant dense<0.000000e+00> : vector<16xf32>
    %52 = vector.multi_reduction <add>, %51, %cst_30 [1] : vector<16x128xf32> to vector<16xf32>
    %53 = vector.shape_cast %52 : vector<16xf32> to vector<16x1xf32>
    %cst_31 = arith.constant 3.125000e-02 : f32
    %54 = vector.broadcast %cst_31 : f32 to vector<16x1xf32>
    %55 = arith.mulf %53, %54 : vector<16x1xf32>
    %56 = arith.mulf %50, %50 : vector<16x1xf32>
    %57 = arith.subf %55, %56 : vector<16x1xf32>
    %58 = vector.broadcast %50 : vector<16x1xf32> to vector<16x128xf32>
    %59 = arith.subf %46, %58 : vector<16x128xf32>
    %cst_32 = arith.constant 9.99999974E-6 : f32
    %60 = vector.broadcast %cst_32 : f32 to vector<16x1xf32>
    %61 = arith.addf %57, %60 : vector<16x1xf32>
    %62 = math.rsqrt %61 : vector<16x1xf32>
    %63 = vector.broadcast %62 : vector<16x1xf32> to vector<16x128xf32>
    %64 = arith.mulf %59, %63 : vector<16x128xf32>
    %c0_33 = arith.constant 0 : index
    %c0_34 = arith.constant 0 : index
    %65 = vector.load %arg7[%c0_33, %c0_34] : memref<1x128xf32, #tpu.memory_space<vmem>>, vector<1x128xf32>
    %66 = vector.broadcast %65 : vector<1x128xf32> to vector<16x128xf32>
    %67 = arith.mulf %64, %66 : vector<16x128xf32>
    %c0_35 = arith.constant 0 : index
    %c0_36 = arith.constant 0 : index
    %68 = vector.load %arg8[%c0_35, %c0_36] : memref<1x128xf32, #tpu.memory_space<vmem>>, vector<1x128xf32>
    %69 = vector.broadcast %68 : vector<1x128xf32> to vector<16x128xf32>
    %70 = arith.addf %67, %69 : vector<16x128xf32>
    %c0_37 = arith.constant 0 : index
    %c0_38 = arith.constant 0 : index
    %71 = vector.load %arg9[%c0_37, %c0_38] : memref<16x128xf32, #tpu.memory_space<vmem>>, vector<16x128xf32>
    tpu.vector_store %arg9[%c0_37, %c0_38], %70 {strides = array<i32>} : memref<16x128xf32, #tpu.memory_space<vmem>>, vector<16x128xf32>,
    return
  }
  func.func @transform_0(%arg0: i32) -> (i32, i32) {
    %c0_i32 = arith.constant 0 : i32
    %c0_i32_0 = arith.constant 0 : i32
    return %arg0, %c0_i32 : i32, i32
  }
  func.func @transform_1(%arg0: i32) -> (i32, i32) {
    %c1_i32 = arith.constant 1 : i32
    %0 = arith.muli %arg0, %c1_i32 : i32
    %c1_i32_0 = arith.constant 1 : i32
    %1 = arith.subi %0, %c1_i32_0 : i32
    %c0_i32 = arith.constant 0 : i32
    %2 = arith.maxsi %1, %c0_i32 : i32
    %c0_i32_1 = arith.constant 0 : i32
    %c0_i32_2 = arith.constant 0 : i32
    return %2, %c0_i32_1 : i32, i32
  }
  func.func @transform_2(%arg0: i32) -> (i32, i32) {
    %c0_i32 = arith.constant 0 : i32
    %c0_i32_0 = arith.constant 0 : i32
    %c0_i32_1 = arith.constant 0 : i32
    return %c0_i32, %c0_i32_0 : i32, i32
  }
  func.func @transform_3(%arg0: i32) -> (i32, i32) {
    %c0_i32 = arith.constant 0 : i32
    %c0_i32_0 = arith.constant 0 : i32
    %c0_i32_1 = arith.constant 0 : i32
    return %c0_i32, %c0_i32_0 : i32, i32
  }
  func.func @transform_4(%arg0: i32) -> (i32, i32) {
    %c0_i32 = arith.constant 0 : i32
    %c0_i32_0 = arith.constant 0 : i32
    %c0_i32_1 = arith.constant 0 : i32
    return %c0_i32, %c0_i32_0 : i32, i32
  }
  func.func @transform_5(%arg0: i32) -> (i32, i32) {
    %c0_i32 = arith.constant 0 : i32
    %c0_i32_0 = arith.constant 0 : i32
    %c0_i32_1 = arith.constant 0 : i32
    return %c0_i32, %c0_i32_0 : i32, i32
  }
  func.func @transform_6(%arg0: i32) -> (i32, i32) {
    %c0_i32 = arith.constant 0 : i32
    %c0_i32_0 = arith.constant 0 : i32
    %c0_i32_1 = arith.constant 0 : i32
    return %c0_i32, %c0_i32_0 : i32, i32
  }
  func.func @transform_7(%arg0: i32) -> (i32, i32) {
    %c0_i32 = arith.constant 0 : i32
    %c0_i32_0 = arith.constant 0 : i32
    %c0_i32_1 = arith.constant 0 : i32
    return %c0_i32, %c0_i32_0 : i32, i32
  }
  func.func @transform_8(%arg0: i32) -> (i32, i32) {
    %c0_i32 = arith.constant 0 : i32
    %c0_i32_0 = arith.constant 0 : i32
    return %arg0, %c0_i32 : i32, i32
  }
}

</mosaic_0001>

<llo_original>
// kernel: tpu_custom_call.1
$region0: #{tpu_custom_call.1}
  #allocation0 [shape = 'u32[]', space=smem, size = 0x4, offset = 0x4, fixed_abs, tag = 'smem constant byte address 0x4 - core index']
  #allocation1 [shape = 'u32[144,128]{1,0:T(1,128)}', space=vmem, size = 0x12000, scoped, tag = 'internal scratch']
  #allocation2 [shape = 'f32[32,128]{1,0:T(8,128)}', space=vmem, size = 0x4000, scoped, tag = 'scratch operand']
  #allocation3 [shape = 'f32[16,128]{1,0:T(8,128)}', space=vmem, size = 0x2000, scoped, tag = 'scratch operand']
  %s0 = inlined_call_operand.hbm [shape: f32[64,128], index: 0, kind: input, shape index: {}]
  %s1 = inlined_call_operand.hbm [shape: f32[64,128], index: 1, kind: input, shape index: {}]
  %s2 = inlined_call_operand.hbm [shape: bf16[128,128], index: 2, kind: input, shape index: {}]
  %s3 = inlined_call_operand.vmem [shape: f32[8,128], index: 3, kind: input, shape index: {}]
  %s4 = inlined_call_operand.hbm [shape: bf16[128,128], index: 4, kind: input, shape index: {}]
  %s5 = inlined_call_operand.vmem [shape: f32[1,128], index: 5, kind: input, shape index: {}]
  %s6 = inlined_call_operand.vmem [shape: f32[1,128], index: 6, kind: input, shape index: {}]
  %s7 = inlined_call_operand.vmem [shape: f32[1,128], index: 7, kind: input, shape index: {}]
  %s8 = inlined_call_operand.hbm [shape: f32[64,128], index: 8, kind: output, shape index: {}]
  %s9 = sld [smem:[#allocation0]]
  $region89: #{tpu_custom_call.1} parent=0
    _
  %s11 = ssub.s32 1, %s9
  %s12 = scalar_select 0, %s11, %s9
  $region1: #{tpu_custom_call.1} parent=0
    #allocation4 [shape = 'u8[16384]{0}', space=vmem, size = 0x4000, scoped, tag = 'input window, operand 0']
    #allocation5 [shape = 's32[2]{0}', space=sflag, size = 0x8, scoped, tag = 'scoped memory for tpu_custom_call.1']
    #allocation6 [shape = 's32[2]{0}', space=sflag, size = 0x8, scoped, tag = 'scoped memory for tpu_custom_call.1']
    #allocation7 [shape = 'u8[16384]{0}', space=vmem, size = 0x4000, scoped, tag = 'input window, operand 1']
    #allocation8 [shape = 's32[2]{0}', space=sflag, size = 0x8, scoped, tag = 'scoped memory for tpu_custom_call.1']
    #allocation9 [shape = 'u8[32768]{0}', space=vmem, size = 0x8000, scoped, tag = 'input window, operand 2, single buffered']
    #allocation10 [shape = 'u8[32768]{0}', space=vmem, size = 0x8000, scoped, tag = 'input window, operand 4, single buffered']
    #allocation11 [shape = 's32[1]{0}', space=sflag, size = 0x4, scoped, tag = 'scoped memory for tpu_custom_call.1']
    #allocation12 [shape = 'u8[16384]{0}', space=vmem, size = 0x4000, scoped, tag = 'output window, operand 0']
    %13 = vsyncpa [#allocation5], 0
    %s14 = scalar_lea.sflag [#allocation5], 1
    %15 = vsyncpa %s14, 0
    %16 = vsyncpa [#allocation8], 0
    %s17 = scalar_lea.sflag [#allocation8], 1
    %18 = vsyncpa %s17, 0
    %19 = vsyncpa [#allocation11], 0
    %20 = vsyncpa [#allocation6], 0
    %s21 = scalar_lea.sflag [#allocation6], 1
    %22 = vsyncpa %s21, 0
    loop: start=0, step=1, limit=6
    $region2: #{tpu_custom_call.1} parent=1 // loop_pre_header
      _
    $region3: #{tpu_custom_call.1} parent=1 // loop_header
      %s24 = sphi 0, %s28
      %p25 = scmp.ge.s32.totalorder %s24, 6
      %s34 = sphi 0, %s36
      %s37 = sphi 0, %s34
      %s38 = sphi 0, %s37
      %s54 = sphi 0, %s38
      %s66 = sphi 0, %s68
      %s69 = sphi 0, %s66
      %s70 = sphi 0, %s69
      %s86 = sphi 0, %s70
      %s90 = sphi 0, %s90
      %s92 = sphi 0, %s90
      %s93 = sphi 0, %s92
      %s107 = sphi 0, %s93
      %s111 = sphi 0, %s111
      %s113 = sphi 0, %s111
      %s114 = sphi 0, %s113
      %s128 = sphi 0, %s114
      %s132 = sphi 0, %s132
      %s134 = sphi 0, %s132
      %s135 = sphi 0, %s134
      %s149 = sphi 0, %s135
      %s153 = sphi 0, %s153
      %s155 = sphi 0, %s153
      %s156 = sphi 0, %s155
      %s170 = sphi 0, %s156
      %s174 = sphi 0, %s174
      %s176 = sphi 0, %s174
      %s177 = sphi 0, %s176
      %s191 = sphi 0, %s177
      %s195 = sphi 0, %s195
      %s197 = sphi 0, %s195
      %s198 = sphi 0, %s197
      %s212 = sphi 0, %s198
      %s218 = sphi 0, %s220
      %s221 = sphi 0, %s218
      %s222 = sphi 0, %s221
      %s238 = sphi 0, %s222
    $region4: #{tpu_custom_call.1} parent=1 // loop_header_branch
      %27 = sbr.rel (%p25) target = $region8
    $region5: #{tpu_custom_call.1} parent=1 // loop_body
      %s29 = ssub.s32 %s24, 1
      %s30 = ssub.s32 %s24, 2
      %s31 = sadd.s32 %s24, 1
      %s32 = ssub.s32 %s24, %s31
      %p33 = scmp.eq.s32.totalorder %s32, 0
      %s35 = sadd.s32 %s34, 1
      %s36 = scalar_select %p33, %s34, %s35
      %p39 = pneg %p33
      %p40 = scmp.eq.s32.totalorder %s24, 3
      %p41 = por %p39, %p40
      %p42 = scmp.ne.s32.totalorder %s34, %s37
      %p43 = scmp.eq.s32.totalorder %s24, 0
      %p44 = por %p42, %p43
      %p45 = scmp.ne.s32.totalorder %s34, %s37
      %p46 = scmp.eq.s32.totalorder %s29, 3
      %p47 = por %p45, %p46
      %p48 = scmp.ne.s32.totalorder %s37, %s38
      %p49 = scmp.eq.s32.totalorder %s29, 0
      %p50 = por %p48, %p49
      %p51 = scmp.ne.s32.totalorder %s37, %s38
      %p52 = scmp.eq.s32.totalorder %s30, 3
      %p53 = por %p51, %p52
      %p55 = scmp.ne.s32.totalorder %s38, %s54
      %p56 = scmp.eq.s32.totalorder %s30, 0
      %p57 = por %p55, %p56
      %s58 = ssub.s32 %s24, 1
      %p59 = scmp.gt.s32.totalorder %s58, 0
      %s60 = scalar_select %p59, %s58, 0
      %s61 = ssub.s32 %s31, 1
      %p62 = scmp.gt.s32.totalorder %s61, 0
      %s63 = scalar_select %p62, %s61, 0
      %s64 = ssub.s32 %s60, %s63
      %p65 = scmp.eq.s32.totalorder %s64, 0
      %s67 = sadd.s32 %s66, 1
      %s68 = scalar_select %p65, %s66, %s67
      %p71 = pneg %p65
      %p72 = scmp.eq.s32.totalorder %s24, 3
      %p73 = por %p71, %p72
      %p74 = scmp.ne.s32.totalorder %s66, %s69
      %p75 = scmp.eq.s32.totalorder %s24, 0
      %p76 = por %p74, %p75
      %p77 = scmp.ne.s32.totalorder %s66, %s69
      %p78 = scmp.eq.s32.totalorder %s29, 3
      %p79 = por %p77, %p78
      %p80 = scmp.ne.s32.totalorder %s69, %s70
      %p81 = scmp.eq.s32.totalorder %s29, 0
      %p82 = por %p80, %p81
      %p83 = scmp.ne.s32.totalorder %s69, %s70
      %p84 = scmp.eq.s32.totalorder %s30, 3
      %p85 = por %p83, %p84
      %p87 = scmp.ne.s32.totalorder %s70, %s86
      %p88 = scmp.eq.s32.totalorder %s30, 0
      %p89 = por %p87, %p88
      %s91 = sadd.s32 %s90, 1
      %p94 = scmp.eq.s32.totalorder %s24, 3
      %p95 = scmp.ne.s32.totalorder %s90, %s92
      %p96 = scmp.eq.s32.totalorder %s24, 0
      %p97 = por %p95, %p96
      %p98 = scmp.ne.s32.totalorder %s90, %s92
      %p99 = scmp.eq.s32.totalorder %s29, 3
      %p100 = por %p98, %p99
      %p101 = scmp.ne.s32.totalorder %s92, %s93
      %p102 = scmp.eq.s32.totalorder %s29, 0
      %p103 = por %p101, %p102
      %p104 = scmp.ne.s32.totalorder %s92, %s93
      %p105 = scmp.eq.s32.totalorder %s30, 3
      %p106 = por %p104, %p105
      %p108 = scmp.ne.s32.totalorder %s93, %s107
      %p109 = scmp.eq.s32.totalorder %s30, 0
      %p110 = por %p108, %p109
      %s112 = sadd.s32 %s111, 1
      %p115 = scmp.eq.s32.totalorder %s24, 3
      %p116 = scmp.ne.s32.totalorder %s111, %s113
      %p117 = scmp.eq.s32.totalorder %s24, 0
      %p118 = por %p116, %p117
      %p119 = scmp.ne.s32.totalorder %s111, %s113
      %p120 = scmp.eq.s32.totalorder %s29, 3
      %p121 = por %p119, %p120
      %p122 = scmp.ne.s32.totalorder %s113, %s114
      %p123 = scmp.eq.s32.totalorder %s29, 0
      %p124 = por %p122, %p123
      %p125 = scmp.ne.s32.totalorder %s113, %s114
      %p126 = scmp.eq.s32.totalorder %s30, 3
      %p127 = por %p125, %p126
      %p129 = scmp.ne.s32.totalorder %s114, %s128
      %p130 = scmp.eq.s32.totalorder %s30, 0
      %p131 = por %p129, %p130
      %s133 = sadd.s32 %s132, 1
      %p136 = scmp.eq.s32.totalorder %s24, 3
      %p137 = scmp.ne.s32.totalorder %s132, %s134
      %p138 = scmp.eq.s32.totalorder %s24, 0
      %p139 = por %p137, %p138
      %p140 = scmp.ne.s32.totalorder %s132, %s134
      %p141 = scmp.eq.s32.totalorder %s29, 3
      %p142 = por %p140, %p141
      %p143 = scmp.ne.s32.totalorder %s134, %s135
      %p144 = scmp.eq.s32.totalorder %s29, 0
      %p145 = por %p143, %p144
      %p146 = scmp.ne.s32.totalorder %s134, %s135
      %p147 = scmp.eq.s32.totalorder %s30, 3
      %p148 = por %p146, %p147
      %p150 = scmp.ne.s32.totalorder %s135, %s149
      %p151 = scmp.eq.s32.totalorder %s30, 0
      %p152 = por %p150, %p151
      %s154 = sadd.s32 %s153, 1
      %p157 = scmp.eq.s32.totalorder %s24, 3
      %p158 = scmp.ne.s32.totalorder %s153, %s155
      %p159 = scmp.eq.s32.totalorder %s24, 0
      %p160 = por %p158, %p159
      %p161 = scmp.ne.s32.totalorder %s153, %s155
      %p162 = scmp.eq.s32.totalorder %s29, 3
      %p163 = por %p161, %p162
      %p164 = scmp.ne.s32.totalorder %s155, %s156
      %p165 = scmp.eq.s32.totalorder %s29, 0
      %p166 = por %p164, %p165
      %p167 = scmp.ne.s32.totalorder %s155, %s156
      %p168 = scmp.eq.s32.totalorder %s30, 3
      %p169 = por %p167, %p168
      %p171 = scmp.ne.s32.totalorder %s156, %s170
      %p172 = scmp.eq.s32.totalorder %s30, 0
      %p173 = por %p171, %p172
      %s175 = sadd.s32 %s174, 1
      %p178 = scmp.eq.s32.totalorder %s24, 3
      %p179 = scmp.ne.s32.totalorder %s174, %s176
      %p180 = scmp.eq.s32.totalorder %s24, 0
      %p181 = por %p179, %p180
      %p182 = scmp.ne.s32.totalorder %s174, %s176
      %p183 = scmp.eq.s32.totalorder %s29, 3
      %p184 = por %p182, %p183
      %p185 = scmp.ne.s32.totalorder %s176, %s177
      %p186 = scmp.eq.s32.totalorder %s29, 0
      %p187 = por %p185, %p186
      %p188 = scmp.ne.s32.totalorder %s176, %s177
      %p189 = scmp.eq.s32.totalorder %s30, 3
      %p190 = por %p188, %p189
      %p192 = scmp.ne.s32.totalorder %s177, %s191
      %p193 = scmp.eq.s32.totalorder %s30, 0
      %p194 = por %p192, %p193
      %s196 = sadd.s32 %s195, 1
      %p199 = scmp.eq.s32.totalorder %s24, 3
      %p200 = scmp.ne.s32.totalorder %s195, %s197
      %p201 = scmp.eq.s32.totalorder %s24, 0
      %p202 = por %p200, %p201
      %p203 = scmp.ne.s32.totalorder %s195, %s197
      %p204 = scmp.eq.s32.totalorder %s29, 3
      %p205 = por %p203, %p204
      %p206 = scmp.ne.s32.totalorder %s197, %s198
      %p207 = scmp.eq.s32.totalorder %s29, 0
      %p208 = por %p206, %p207
      %p209 = scmp.ne.s32.totalorder %s197, %s198
      %p210 = scmp.eq.s32.totalorder %s30, 3
      %p211 = por %p209, %p210
      %p213 = scmp.ne.s32.totalorder %s198, %s212
      %p214 = scmp.eq.s32.totalorder %s30, 0
      %p215 = por %p213, %p214
      %s216 = ssub.s32 %s24, %s31
      %p217 = scmp.eq.s32.totalorder %s216, 0
      %s219 = sadd.s32 %s218, 1
      %s220 = scalar_select %p217, %s218, %s219
      %p223 = pneg %p217
      %p224 = scmp.eq.s32.totalorder %s24, 3
      %p225 = por %p223, %p224
      %p226 = scmp.ne.s32.totalorder %s218, %s221
      %p227 = scmp.eq.s32.totalorder %s24, 0
      %p228 = por %p226, %p227
      %p229 = scmp.ne.s32.totalorder %s218, %s221
      %p230 = scmp.eq.s32.totalorder %s29, 3
      %p231 = por %p229, %p230
      %p232 = scmp.ne.s32.totalorder %s221, %s222
      %p233 = scmp.eq.s32.totalorder %s29, 0
      %p234 = por %p232, %p233
      %p235 = scmp.ne.s32.totalorder %s221, %s222
      %p236 = scmp.eq.s32.totalorder %s30, 3
      %p237 = por %p235, %p236
      %p239 = scmp.ne.s32.totalorder %s222, %s238
      %p240 = scmp.eq.s32.totalorder %s30, 0
      %p241 = por %p239, %p240
      %p242 = scmp.le.s32.totalorder 1, %s24
      %p243 = scmp.lt.s32.totalorder %s24, 5
      %p244 = pnand %p242, %p243
      %p245 = pneg %p244
      // Predicated region
      $region9: #{tpu_custom_call.1} parent=5 // pred_check
        _
      $region10: #{tpu_custom_call.1} parent=5 // pred_check_branch
        %247 = sbr.rel (%p244) target = $region12
      $region11: #{tpu_custom_call.1} parent=5 // pred_region
        %s248 = ssub.s32 %s24, 1
        // Predicated region
        $region13: #{tpu_custom_call.1} parent=11 // pred_check
          %p249 = pneg %p103
        $region14: #{tpu_custom_call.1} parent=11 // pred_check_branch
          %251 = sbr.rel (%p249) target = $region16
        $region15: #{tpu_custom_call.1} parent=11 // pred_region
          %s253 = ssub.s32 1024, 1024
          %254 = vsyncadd [#allocation8], %s253
          %s255 = sshll.u32 [#allocation9], 4
          %s256 = int_to_ptr.vmem [resolvable:$true] %s255
          %261 = dma.hbm_to_vmem [thread:$0]  %s2, 1024, %s256, [#allocation8], 64, 64, 4
        $region16: #{tpu_custom_call.1} parent=11 // pred_fallthru
          _
        // Predicated region
        $region17: #{tpu_custom_call.1} parent=11 // pred_check
          %p262 = pneg %p124
        $region18: #{tpu_custom_call.1} parent=11 // pred_check_branch
          %264 = sbr.rel (%p262) target = $region20
        $region19: #{tpu_custom_call.1} parent=11 // pred_region
          _
        $region20: #{tpu_custom_call.1} parent=11 // pred_fallthru
          _
        // Predicated region
        $region21: #{tpu_custom_call.1} parent=11 // pred_check
          %p265 = pneg %p145
        $region22: #{tpu_custom_call.1} parent=11 // pred_check_branch
          %267 = sbr.rel (%p265) target = $region24
        $region23: #{tpu_custom_call.1} parent=11 // pred_region
          %s269 = ssub.s32 1024, 1024
          %270 = vsyncadd [#allocation11], %s269
          %s271 = sshll.u32 [#allocation10], 4
          %s272 = int_to_ptr.vmem [resolvable:$true] %s271
          %277 = dma.hbm_to_vmem [thread:$0]  %s4, 1024, %s272, [#allocation11], 64, 64, 4
        $region24: #{tpu_custom_call.1} parent=11 // pred_fallthru
          _
        // Predicated region
        $region25: #{tpu_custom_call.1} parent=11 // pred_check
          %p278 = pneg %p166
        $region26: #{tpu_custom_call.1} parent=11 // pred_check_branch
          %280 = sbr.rel (%p278) target = $region28
        $region27: #{tpu_custom_call.1} parent=11 // pred_region
          _
        $region28: #{tpu_custom_call.1} parent=11 // pred_fallthru
          _
        // Predicated region
        $region29: #{tpu_custom_call.1} parent=11 // pred_check
          %p281 = pneg %p187
        $region30: #{tpu_custom_call.1} parent=11 // pred_check_branch
          %283 = sbr.rel (%p281) target = $region32
        $region31: #{tpu_custom_call.1} parent=11 // pred_region
          _
        $region32: #{tpu_custom_call.1} parent=11 // pred_fallthru
          _
        // Predicated region
        $region33: #{tpu_custom_call.1} parent=11 // pred_check
          %p284 = pneg %p208
        $region34: #{tpu_custom_call.1} parent=11 // pred_check_branch
          %286 = sbr.rel (%p284) target = $region36
        $region35: #{tpu_custom_call.1} parent=11 // pred_region
          _
        $region36: #{tpu_custom_call.1} parent=11 // pred_fallthru
          _
      $region12: #{tpu_custom_call.1} parent=5 // pred_fallthru
        _
      %p287 = scmp.lt.s32.totalorder %s24, 4
      // Predicated region
      $region37: #{tpu_custom_call.1} parent=5 // pred_check
        %p288 = pneg %p287
      $region38: #{tpu_custom_call.1} parent=5 // pred_check_branch
        %290 = sbr.rel (%p288) target = $region40
      $region39: #{tpu_custom_call.1} parent=5 // pred_region
        // Predicated region
        $region41: #{tpu_custom_call.1} parent=39 // pred_check
          %p291 = pneg %p44
        $region42: #{tpu_custom_call.1} parent=39 // pred_check_branch
          %293 = sbr.rel (%p291) target = $region44
        $region43: #{tpu_custom_call.1} parent=39 // pred_region
          %s294 = sand.u32 %s34, 1
          %s295 = scalar_lea.sflag [#allocation5], %s294
          %s296 = sand.u32 %s34, 1
          %s297 = smul.addr %s296, 16
          %s298 = scalar_lea.vmem [#allocation4], %s297
          %s299 = smul.u32 2, %s24
          %s301 = ssub.s32 256, 256
          %302 = vsyncadd %s295, %s301
          %s303 = smul.addr %s299, 128
          %s304 = scalar_lea.hbm %s0, %s303
          %s305 = sshll.u32 %s298, 4
          %s306 = int_to_ptr.vmem [resolvable:$true] %s305
          %311 = dma.hbm_to_vmem [thread:$0]  %s304, 256, %s306, %s295, 128, 128, 8
        $region44: #{tpu_custom_call.1} parent=39 // pred_fallthru
          _
        // Predicated region
        $region45: #{tpu_custom_call.1} parent=39 // pred_check
          %p312 = pneg %p76
        $region46: #{tpu_custom_call.1} parent=39 // pred_check_branch
          %314 = sbr.rel (%p312) target = $region48
        $region47: #{tpu_custom_call.1} parent=39 // pred_region
          %s315 = sand.u32 %s24, 1
          %s316 = scalar_lea.sflag [#allocation8], %s315
          %s317 = sand.u32 %s66, 1
          %s318 = smul.addr %s317, 16
          %s319 = scalar_lea.vmem [#allocation7], %s318
          %s320 = ssub.s32 %s24, 1
          %p321 = scmp.gt.s32.totalorder %s320, 0
          %s322 = scalar_select %p321, %s320, 0
          %s323 = smul.u32 2, %s322
          %s325 = ssub.s32 256, 256
          %326 = vsyncadd %s316, %s325
          %s327 = smul.addr %s323, 128
          %s328 = scalar_lea.hbm %s1, %s327
          %s329 = sshll.u32 %s319, 4
          %s330 = int_to_ptr.vmem [resolvable:$true] %s329
          %335 = dma.hbm_to_vmem [thread:$0]  %s328, 256, %s330, %s316, 128, 128, 8
        $region48: #{tpu_custom_call.1} parent=39 // pred_fallthru
          _
      $region40: #{tpu_custom_call.1} parent=5 // pred_fallthru
        _
      %p336 = scmp.le.s32.totalorder 1, %s24
      %p337 = scmp.lt.s32.totalorder %s24, 5
      %p338 = pnand %p336, %p337
      %p339 = pneg %p338
      // Predicated region
      $region49: #{tpu_custom_call.1} parent=5 // pred_check
        _
      $region50: #{tpu_custom_call.1} parent=5 // pred_check_branch
        %341 = sbr.rel (%p338) target = $region52
      $region51: #{tpu_custom_call.1} parent=5 // pred_region
        %s342 = ssub.s32 %s24, 1
        %s343 = sand.u32 %s37, 1
        %s344 = scalar_lea.sflag [#allocation5], %s343
        %s345 = sand.u32 %s37, 1
        %s346 = smul.addr %s345, 16
        %s347 = scalar_lea.vmem [#allocation4], %s346
        // Predicated region
        $region53: #{tpu_custom_call.1} parent=51 // pred_check
          %p348 = pneg %p50
        $region54: #{tpu_custom_call.1} parent=51 // pred_check_branch
          %350 = sbr.rel (%p348) target = $region56
        $region55: #{tpu_custom_call.1} parent=51 // pred_region
          %351 = dma.done %s344, 256
        $region56: #{tpu_custom_call.1} parent=51 // pred_fallthru
          _
        %s352 = sand.u32 %s29, 1
        %s353 = scalar_lea.sflag [#allocation8], %s352
        %s354 = sand.u32 %s69, 1
        %s355 = smul.addr %s354, 16
        %s356 = scalar_lea.vmem [#allocation7], %s355
        // Predicated region
        $region57: #{tpu_custom_call.1} parent=51 // pred_check
          %p357 = pneg %p82
        $region58: #{tpu_custom_call.1} parent=51 // pred_check_branch
          %359 = sbr.rel (%p357) target = $region60
        $region59: #{tpu_custom_call.1} parent=51 // pred_region
          %360 = dma.done %s353, 256
        $region60: #{tpu_custom_call.1} parent=51 // pred_fallthru
          _
        // Predicated region
        $region61: #{tpu_custom_call.1} parent=51 // pred_check
          %p361 = pneg %p103
        $region62: #{tpu_custom_call.1} parent=51 // pred_check_branch
          %363 = sbr.rel (%p361) target = $region64
        $region63: #{tpu_custom_call.1} parent=51 // pred_region
          %364 = dma.done [#allocation8], 1024
        $region64: #{tpu_custom_call.1} parent=51 // pred_fallthru
          _
        // Predicated region
        $region65: #{tpu_custom_call.1} parent=51 // pred_check
          %p365 = pneg %p145
        $region66: #{tpu_custom_call.1} parent=51 // pred_check_branch
          %367 = sbr.rel (%p365) target = $region68
        $region67: #{tpu_custom_call.1} parent=51 // pred_region
          %368 = dma.done [#allocation11], 1024
        $region68: #{tpu_custom_call.1} parent=51 // pred_fallthru
          _
        %s369 = sand.u32 %s37, 1
        %s370 = scalar_lea.sflag [#allocation5], %s369
        %s371 = sand.u32 %s37, 1
        %s372 = smul.addr %s371, 16
        %s373 = scalar_lea.vmem [#allocation4], %s372
        %p374 = pneg %p50
        %p375 = pneg %p47
        %s376 = sand.u32 %s29, 1
        %s377 = scalar_lea.sflag [#allocation8], %s376
        %s378 = sand.u32 %s69, 1
        %s379 = smul.addr %s378, 16
        %s380 = scalar_lea.vmem [#allocation7], %s379
        %p381 = pneg %p82
        %p382 = pneg %p79
        %p383 = pneg %p103
        %p384 = pneg %p100
        %p385 = pneg %p124
        %p386 = pneg %p121
        %p387 = pneg %p145
        %p388 = pneg %p142
        %p389 = pneg %p166
        %p390 = pneg %p163
        %p391 = pneg %p187
        %p392 = pneg %p184
        %p393 = pneg %p208
        %p394 = pneg %p205
        %p395 = pneg %p234
        %p396 = pneg %p231
        %s397 = sand.u32 %s221, 1
        %s398 = scalar_lea.sflag [#allocation6], %s397
        %s399 = sand.u32 %s221, 1
        %s400 = smul.addr %s399, 16
        %s401 = scalar_lea.vmem [#allocation12], %s400
        %s402 = smul.u32 2, %s29
        %s403 = ssub.s32 %s29, 1
        %p404 = scmp.gt.s32.totalorder %s403, 0
        %s405 = scalar_select %p404, %s403, 0
        %s406 = smul.u32 2, %s405
        %s407 = smul.u32 2, %s29
        %v409 = vld [vmem:[#allocation9] sm:$0xf]
        %v410 = vld [vmem:[#allocation9 + $0x4] sm:$0xf]
        %v411 = vld [vmem:[#allocation9 + $0x8] sm:$0xf]
        %v412 = vld [vmem:[#allocation9 + $0xc] sm:$0xf]
        %v413 = vld [vmem:[#allocation9 + $0x10] sm:$0xf]
        %v414 = vld [vmem:[#allocation9 + $0x14] sm:$0xf]
        %v415 = vld [vmem:[#allocation9 + $0x18] sm:$0xf]
        %v416 = vld [vmem:[#allocation9 + $0x1c] sm:$0xf]
        %v417 = vld [vmem:[#allocation9 + $0x20] sm:$0xf]
        %v418 = vld [vmem:[#allocation9 + $0x24] sm:$0xf]
        %v419 = vld [vmem:[#allocation9 + $0x28] sm:$0xf]
        %v420 = vld [vmem:[#allocation9 + $0x2c] sm:$0xf]
        %v421 = vld [vmem:[#allocation9 + $0x30] sm:$0xf]
        %v422 = vld [vmem:[#allocation9 + $0x34] sm:$0xf]
        %v423 = vld [vmem:[#allocation9 + $0x38] sm:$0xf]
        %v424 = vld [vmem:[#allocation9 + $0x3c] sm:$0xf]
        %p425 = scmp.eq.s32.totalorder %s29, 0
        // Predicated region
        $region69: #{tpu_custom_call.1} parent=51 // pred_check
          %p426 = pneg %p425
        $region70: #{tpu_custom_call.1} parent=51 // pred_check_branch
          %428 = sbr.rel (%p426) target = $region72
        $region71: #{tpu_custom_call.1} parent=51 // pred_region
          %429 = vst [vmem:[#allocation2] sm:$0xff] 0.0
          %430 = vst [vmem:[#allocation2 + $0x8] sm:$0xff] 0.0
        $region72: #{tpu_custom_call.1} parent=51 // pred_fallthru
          _
        %p431 = scmp.gt.s32.totalorder %s29, 0
        // Predicated region
        $region73: #{tpu_custom_call.1} parent=51 // pred_check
          %p432 = pneg %p431
        $region74: #{tpu_custom_call.1} parent=51 // pred_check_branch
          %434 = sbr.rel (%p432) target = $region76
        $region75: #{tpu_custom_call.1} parent=51 // pred_region
          %v435 = vld [vmem:[%s356] sm:$0xff]
          %v436 = vld [vmem:[%s356 + $0x8] sm:$0xff]
          %v437 = vpack.c.bf16 %v436, %v435
          %v454 = vunpack.c.l.b16 %v409
          %v455 = vunpack.c.l.b16 %v410
          %v456 = vunpack.c.l.b16 %v411
          %v457 = vunpack.c.l.b16 %v412
          %v458 = vunpack.c.l.b16 %v413
          %v459 = vunpack.c.l.b16 %v414
          %v460 = vunpack.c.l.b16 %v415
          %v461 = vunpack.c.l.b16 %v416
          %v462 = vunpack.c.l.b16 %v417
          %v463 = vunpack.c.l.b16 %v418
          %v464 = vunpack.c.l.b16 %v419
          %v465 = vunpack.c.l.b16 %v420
          %v466 = vunpack.c.l.b16 %v421
          %v467 = vunpack.c.l.b16 %v422
          %v468 = vunpack.c.l.b16 %v423
          %v469 = vunpack.c.l.b16 %v424
          %v470 = vpack.c.b16 %v455, %v454
          %v471 = vpack.c.b16 %v457, %v456
          %v472 = vpack.c.b16 %v459, %v458
          %v473 = vpack.c.b16 %v461, %v460
          %v474 = vpack.c.b16 %v463, %v462
          %v475 = vpack.c.b16 %v465, %v464
          %v476 = vpack.c.b16 %v467, %v466
          %v477 = vpack.c.b16 %v469, %v468
          %486 = vmatprep.subr.bf16.mxu0 0
          %487 = vmatpush1.bf16.msra.mxu0 %v470
          %488 = vmatprep.subr.bf16.mxu0 0
          %489 = vmatpush1.bf16.msra.mxu0 %v471
          %490 = vmatprep.subr.bf16.mxu0 0
          %491 = vmatpush1.bf16.msra.mxu0 %v472
          %492 = vmatprep.subr.bf16.mxu0 0
          %493 = vmatpush1.bf16.msra.mxu0 %v473
          %494 = vmatprep.subr.bf16.mxu0 0
          %495 = vmatpush1.bf16.msra.mxu0 %v474
          %496 = vmatprep.subr.bf16.mxu0 0
          %497 = vmatpush1.bf16.msra.mxu0 %v475
          %498 = vmatprep.subr.bf16.mxu0 0
          %499 = vmatpush1.bf16.msra.mxu0 %v476
          %500 = vmatprep.subr.bf16.mxu0 0
          %501 = vmatpush1.bf16.msra.mxu0 %v477
          %502 = vmatprep.subr.bf16.mxu0 0
          %503 = vmatpush1.bf16.msra.mxu0 0
          %504 = vmatprep.subr.bf16.mxu0 0
          %505 = vmatpush1.bf16.msra.mxu0 0
          %506 = vmatprep.subr.bf16.mxu0 0
          %507 = vmatpush1.bf16.msra.mxu0 0
          %508 = vmatprep.subr.bf16.mxu0 0
          %509 = vmatpush1.bf16.msra.mxu0 0
          %510 = vmatprep.subr.bf16.mxu0 0
          %511 = vmatpush1.bf16.msra.mxu0 0
          %512 = vmatprep.subr.bf16.mxu0 0
          %513 = vmatpush1.bf16.msra.mxu0 0
          %514 = vmatprep.subr.bf16.mxu0 0
          %515 = vmatpush1.bf16.msra.mxu0 0
          %516 = vmatprep.subr.bf16.mxu0 0
          %517 = vmatpush1.bf16.msra.mxu0 0
          %518 = vmatprep.mubr.bf16.mxu0 0
          %519 = vmatmul.mubr.bf16.gmra.mrb[0].mxu0 %v437
          %v520 = vpop.f32.mrb[0].mxu0
          %v521 = vadd.f32 0.0, %v520
          %v522 = vpop.f32.mrb[0].mxu0
          %v523 = vpop.f32.mrb[0].mxu0
          %v524 = vadd.f32 0.0, %v523
          %v525 = vpop.f32.mrb[0].mxu0
          %526 = vdwg.mxu0
          %528 = vset.pattern.permute.xlu0 32
          %529 = vperm.xlu0 %528, %v435
          %v530 = vpop.permute.xlu0 %529
          %533 = vset.pattern.permute.xlu0 32
          %534 = vperm.xlu0 %533, %v436
          %v535 = vpop.permute.xlu0 %534
          %v537 = vmul.f32 %v530, %v521
          %v538 = vmul.f32 %v535, %v524
          %539 = vst [vmem:[#allocation2] sm:$0xff] %v537
          %540 = vst [vmem:[#allocation2 + $0x8] sm:$0xff] %v538
        $region76: #{tpu_custom_call.1} parent=51 // pred_fallthru
          _
        %v541 = vld [vmem:[%s347] sm:$0xff]
        %v542 = vld [vmem:[%s347 + $0x8] sm:$0xff]
        %v543 = vpack.c.bf16 %v542, %v541
        %v560 = vunpack.c.l.b16 %v409
        %v561 = vunpack.c.l.b16 %v410
        %v562 = vunpack.c.l.b16 %v411
        %v563 = vunpack.c.l.b16 %v412
        %v564 = vunpack.c.l.b16 %v413
        %v565 = vunpack.c.l.b16 %v414
        %v566 = vunpack.c.l.b16 %v415
        %v567 = vunpack.c.l.b16 %v416
        %v568 = vunpack.c.l.b16 %v417
        %v569 = vunpack.c.l.b16 %v418
        %v570 = vunpack.c.l.b16 %v419
        %v571 = vunpack.c.l.b16 %v420
        %v572 = vunpack.c.l.b16 %v421
        %v573 = vunpack.c.l.b16 %v422
        %v574 = vunpack.c.l.b16 %v423
        %v575 = vunpack.c.l.b16 %v424
        %v576 = vpack.c.b16 %v561, %v560
        %v577 = vpack.c.b16 %v563, %v562
        %v578 = vpack.c.b16 %v565, %v564
        %v579 = vpack.c.b16 %v567, %v566
        %v580 = vpack.c.b16 %v569, %v568
        %v581 = vpack.c.b16 %v571, %v570
        %v582 = vpack.c.b16 %v573, %v572
        %v583 = vpack.c.b16 %v575, %v574
        %592 = vmatprep.subr.bf16.mxu0 0
        %593 = vmatpush1.bf16.msra.mxu0 %v576
        %594 = vmatprep.subr.bf16.mxu0 0
        %595 = vmatpush1.bf16.msra.mxu0 %v577
        %596 = vmatprep.subr.bf16.mxu0 0
        %597 = vmatpush1.bf16.msra.mxu0 %v578
        %598 = vmatprep.subr.bf16.mxu0 0
        %599 = vmatpush1.bf16.msra.mxu0 %v579
        %600 = vmatprep.subr.bf16.mxu0 0
        %601 = vmatpush1.bf16.msra.mxu0 %v580
        %602 = vmatprep.subr.bf16.mxu0 0
        %603 = vmatpush1.bf16.msra.mxu0 %v581
        %604 = vmatprep.subr.bf16.mxu0 0
        %605 = vmatpush1.bf16.msra.mxu0 %v582
        %606 = vmatprep.subr.bf16.mxu0 0
        %607 = vmatpush1.bf16.msra.mxu0 %v583
        %608 = vmatprep.subr.bf16.mxu0 0
        %609 = vmatpush1.bf16.msra.mxu0 0
        %610 = vmatprep.subr.bf16.mxu0 0
        %611 = vmatpush1.bf16.msra.mxu0 0
        %612 = vmatprep.subr.bf16.mxu0 0
        %613 = vmatpush1.bf16.msra.mxu0 0
        %614 = vmatprep.subr.bf16.mxu0 0
        %615 = vmatpush1.bf16.msra.mxu0 0
        %616 = vmatprep.subr.bf16.mxu0 0
        %617 = vmatpush1.bf16.msra.mxu0 0
        %618 = vmatprep.subr.bf16.mxu0 0
        %619 = vmatpush1.bf16.msra.mxu0 0
        %620 = vmatprep.subr.bf16.mxu0 0
        %621 = vmatpush1.bf16.msra.mxu0 0
        %622 = vmatprep.subr.bf16.mxu0 0
        %623 = vmatpush1.bf16.msra.mxu0 0
        %624 = vmatprep.mubr.bf16.mxu0 0
        %625 = vmatmul.mubr.bf16.gmra.mrb[0].mxu0 %v543
        %v626 = vpop.f32.mrb[0].mxu0
        %v627 = vadd.f32 0.0, %v626
        %v628 = vpop.f32.mrb[0].mxu0
        %v629 = vpop.f32.mrb[0].mxu0
        %v630 = vadd.f32 0.0, %v629
        %v631 = vpop.f32.mrb[0].mxu0
        %632 = vdwg.mxu0
        %634 = vset.pattern.permute.xlu0 32
        %635 = vperm.xlu0 %634, %v541
        %v636 = vpop.permute.xlu0 %635
        %639 = vset.pattern.permute.xlu0 32
        %640 = vperm.xlu0 %639, %v542
        %v641 = vpop.permute.xlu0 %640
        %v643 = vmul.f32 %v636, %v627
        %v644 = vmul.f32 %v641, %v630
        %645 = vst [vmem:[#allocation2 + $0x10] sm:$0xff] %v643
        %646 = vst [vmem:[#allocation2 + $0x18] sm:$0xff] %v644
        %v647 = vld [vmem:[%s3] sm:$0xff]
        %v648 = vld [vmem:[#allocation2 + $0x10] sm:$0xff]
        %v649 = vld [vmem:[#allocation2 + $0x18] sm:$0xff]
        %v650 = vlaneseq
        %v651 = vshrl.u32 %v650, 7
        %v652 = vsub.s32 0, %v651
        %v653 = vrot.slane %v647, %v652
        %v654 = vmul.f32 %v648, %v653
        %v655 = vmul.f32 %v649, %v653
        %656 = vst [vmem:[#allocation3] sm:$0xff] %v654
        %657 = vst [vmem:[#allocation3 + $0x8] sm:$0xff] %v655
        %v658 = vld [vmem:[#allocation2 + $0x8] sm:$0xff]
        %v659 = vld [vmem:[#allocation2 + $0x10] sm:$0xff]
        %v660 = vlaneseq
        %v661 = vshrl.u32 %v660, 7
        %v662 = vsub.s32 1, %v661
        %v663 = vrot.slane %v647, %v662
        %v664 = vmul.f32 %v658, %v663
        %v665 = vmul.f32 %v659, %v663
        %v666 = vld [vmem:[#allocation2] sm:$0xff]
        %v667 = vlaneseq
        %v668 = vshrl.u32 %v667, 7
        %v669 = vsub.s32 2, %v668
        %v670 = vrot.slane %v647, %v669
        %v671 = vmul.f32 %v666, %v670
        %v672 = vmul.f32 %v658, %v670
        %v673 = vadd.f32 %v664, %v671
        %v674 = vadd.f32 %v665, %v672
        %v675 = vld [vmem:[#allocation3] sm:$0xff]
        %v676 = vld [vmem:[#allocation3 + $0x8] sm:$0xff]
        %v677 = vadd.f32 %v675, %v673
        %v678 = vadd.f32 %v676, %v674
        %679 = vst [vmem:[#allocation3] sm:$0xff] %v677
        %680 = vst [vmem:[#allocation3 + $0x8] sm:$0xff] %v678
        %v681 = vld [vmem:[#allocation3] sm:$0xff]
        %v682 = vld [vmem:[#allocation3 + $0x8] sm:$0xff]
        %v683 = vpack.c.bf16 %v682, %v681
        %v684 = vld [vmem:[#allocation10] sm:$0xf]
        %v685 = vld [vmem:[#allocation10 + $0x4] sm:$0xf]
        %v686 = vld [vmem:[#allocation10 + $0x8] sm:$0xf]
        %v687 = vld [vmem:[#allocation10 + $0xc] sm:$0xf]
        %v688 = vld [vmem:[#allocation10 + $0x10] sm:$0xf]
        %v689 = vld [vmem:[#allocation10 + $0x14] sm:$0xf]
        %v690 = vld [vmem:[#allocation10 + $0x18] sm:$0xf]
        %v691 = vld [vmem:[#allocation10 + $0x1c] sm:$0xf]
        %v692 = vld [vmem:[#allocation10 + $0x20] sm:$0xf]
        %v693 = vld [vmem:[#allocation10 + $0x24] sm:$0xf]
        %v694 = vld [vmem:[#allocation10 + $0x28] sm:$0xf]
        %v695 = vld [vmem:[#allocation10 + $0x2c] sm:$0xf]
        %v696 = vld [vmem:[#allocation10 + $0x30] sm:$0xf]
        %v697 = vld [vmem:[#allocation10 + $0x34] sm:$0xf]
        %v698 = vld [vmem:[#allocation10 + $0x38] sm:$0xf]
        %v699 = vld [vmem:[#allocation10 + $0x3c] sm:$0xf]
        %v700 = vld [vmem:[%s5] sm:$0x1]
        %v702 = vlaneseq
        %v703 = vshrl.u32 %v702, 7
        %v704 = vsub.s32 0, %v703
        %v705 = vrot.slane %v700, %v704
        %v723 = vunpack.c.l.b16 %v684
        %v724 = vunpack.c.l.b16 %v685
        %v725 = vunpack.c.l.b16 %v686
        %v726 = vunpack.c.l.b16 %v687
        %v727 = vunpack.c.l.b16 %v688
        %v728 = vunpack.c.l.b16 %v689
        %v729 = vunpack.c.l.b16 %v690
        %v730 = vunpack.c.l.b16 %v691
        %v731 = vunpack.c.l.b16 %v692
        %v732 = vunpack.c.l.b16 %v693
        %v733 = vunpack.c.l.b16 %v694
        %v734 = vunpack.c.l.b16 %v695
        %v735 = vunpack.c.l.b16 %v696
        %v736 = vunpack.c.l.b16 %v697
        %v737 = vunpack.c.l.b16 %v698
        %v738 = vunpack.c.l.b16 %v699
        %v739 = vpack.c.b16 %v724, %v723
        %v740 = vpack.c.b16 %v726, %v725
        %v741 = vpack.c.b16 %v728, %v727
        %v742 = vpack.c.b16 %v730, %v729
        %v743 = vpack.c.b16 %v732, %v731
        %v744 = vpack.c.b16 %v734, %v733
        %v745 = vpack.c.b16 %v736, %v735
        %v746 = vpack.c.b16 %v738, %v737
        %755 = vmatprep.subr.bf16.mxu0 0
        %756 = vmatpush1.bf16.msra.mxu0 %v739
        %757 = vmatprep.subr.bf16.mxu0 0
        %758 = vmatpush1.bf16.msra.mxu0 %v740
        %759 = vmatprep.subr.bf16.mxu0 0
        %760 = vmatpush1.bf16.msra.mxu0 %v741
        %761 = vmatprep.subr.bf16.mxu0 0
        %762 = vmatpush1.bf16.msra.mxu0 %v742
        %763 = vmatprep.subr.bf16.mxu0 0
        %764 = vmatpush1.bf16.msra.mxu0 %v743
        %765 = vmatprep.subr.bf16.mxu0 0
        %766 = vmatpush1.bf16.msra.mxu0 %v744
        %767 = vmatprep.subr.bf16.mxu0 0
        %768 = vmatpush1.bf16.msra.mxu0 %v745
        %769 = vmatprep.subr.bf16.mxu0 0
        %770 = vmatpush1.bf16.msra.mxu0 %v746
        %771 = vmatprep.subr.bf16.mxu0 0
        %772 = vmatpush1.bf16.msra.mxu0 0
        %773 = vmatprep.subr.bf16.mxu0 0
        %774 = vmatpush1.bf16.msra.mxu0 0
        %775 = vmatprep.subr.bf16.mxu0 0
        %776 = vmatpush1.bf16.msra.mxu0 0
        %777 = vmatprep.subr.bf16.mxu0 0
        %778 = vmatpush1.bf16.msra.mxu0 0
        %779 = vmatprep.subr.bf16.mxu0 0
        %780 = vmatpush1.bf16.msra.mxu0 0
        %781 = vmatprep.subr.bf16.mxu0 0
        %782 = vmatpush1.bf16.msra.mxu0 0
        %783 = vmatprep.subr.bf16.mxu0 0
        %784 = vmatpush1.bf16.msra.mxu0 0
        %785 = vmatprep.subr.bf16.mxu0 0
        %786 = vmatpush1.bf16.msra.mxu0 0
        %787 = vmatprep.mubr.bf16.mxu0 0
        %788 = vmatmul.mubr.bf16.gmra.mrb[0].mxu0 %v683
        %v789 = vpop.f32.mrb[0].mxu0
        %v790 = vadd.f32 %v705, %v789
        %v791 = vpop.f32.mrb[0].mxu0
        %v792 = vpop.f32.mrb[0].mxu0
        %v793 = vadd.f32 %v705, %v792
        %v794 = vpop.f32.mrb[0].mxu0
        %795 = vdwg.mxu0
        %v796 = vlaneseq
        %v797 = vand.u32 %v796, 127
        %vm798 = vcmp.eq.s32.totalorder %v797, 32
        %v799 = vsel %vm798, 1, 0
        %vm800 = vcmp.eq.s32.totalorder %v799, 1
        %v801 = vsel %vm800, 0.0, %v541
        %v802 = vsel %vm800, 0.0, %v542
        %v803 = vadd.f32 %v790, %v801
        %v804 = vadd.f32 %v793, %v802
        %805 = vadd.xlane.f32.xlu0 %v803
        %v806 = vpop.xlane.xlu0 %805
        %807 = vadd.xlane.f32.xlu0 %v804
        %v808 = vpop.xlane.xlu0 %807
        %v809 = vmul.f32 %v806, 0.03125
        %v810 = vmul.f32 %v808, 0.03125
        %v811 = vmul.f32 %v803, %v803
        %v812 = vmul.f32 %v804, %v804
        %813 = vadd.xlane.f32.xlu0 %v811
        %v814 = vpop.xlane.xlu0 %813
        %815 = vadd.xlane.f32.xlu0 %v812
        %v816 = vpop.xlane.xlu0 %815
        %v817 = vmul.f32 %v814, 0.03125
        %v818 = vmul.f32 %v816, 0.03125
        %v819 = vmul.f32 %v809, %v809
        %v820 = vmul.f32 %v810, %v810
        %v821 = vsub.f32 %v817, %v819
        %v822 = vsub.f32 %v818, %v820
        %v823 = vsub.f32 %v803, %v809
        %v824 = vsub.f32 %v804, %v810
        %v825 = vadd.f32 %v821, 1e-05
        %v826 = vadd.f32 %v822, 1e-05
        %v827 = vrsqrt.pop %v825
        %v828 = vrsqrt.pop %v826
        %v829 = vmul.f32 %v823, %v827
        %v830 = vmul.f32 %v824, %v828
        %v831 = vld [vmem:[%s6] sm:$0x1]
        %v833 = vlaneseq
        %v834 = vshrl.u32 %v833, 7
        %v835 = vsub.s32 0, %v834
        %v836 = vrot.slane %v831, %v835
        %v838 = vmul.f32 %v829, %v836
        %v839 = vmul.f32 %v830, %v836
        %v840 = vld [vmem:[%s7] sm:$0x1]
        %v842 = vlaneseq
        %v843 = vshrl.u32 %v842, 7
        %v844 = vsub.s32 0, %v843
        %v845 = vrot.slane %v840, %v844
        %v847 = vadd.f32 %v838, %v845
        %v848 = vadd.f32 %v839, %v845
        %849 = vst [vmem:[%s401] sm:$0xff] %v847
        %850 = vst [vmem:[%s401 + $0x8] sm:$0xff] %v848
        %s851 = sand.u32 %s221, 1
        %s852 = scalar_lea.sflag [#allocation6], %s851
        %s853 = sand.u32 %s221, 1
        %s854 = smul.addr %s853, 16
        %s855 = scalar_lea.vmem [#allocation12], %s854
        // Predicated region
        $region77: #{tpu_custom_call.1} parent=51 // pred_check
          %p856 = pneg %p231
        $region78: #{tpu_custom_call.1} parent=51 // pred_check_branch
          %858 = sbr.rel (%p856) target = $region80
        $region79: #{tpu_custom_call.1} parent=51 // pred_region
          %s859 = smul.u32 2, %s29
          %s861 = ssub.s32 256, 256
          %862 = vsyncadd %s852, %s861
          %s863 = smul.addr %s859, 128
          %s864 = scalar_lea.hbm %s8, %s863
          %s865 = sshll.u32 %s855, 4
          %s866 = int_to_ptr.vmem [resolvable:$true] %s865
          %871 = dma.vmem_to_hbm [thread:$0]  %s866, 256, %s864, %s852, 128, 128, 8
        $region80: #{tpu_custom_call.1} parent=51 // pred_fallthru
          _
      $region52: #{tpu_custom_call.1} parent=5 // pred_fallthru
        _
      %p872 = scmp.le.s32.totalorder 2, %s24
      // Predicated region
      $region81: #{tpu_custom_call.1} parent=5 // pred_check
        %p873 = pneg %p872
      $region82: #{tpu_custom_call.1} parent=5 // pred_check_branch
        %875 = sbr.rel (%p873) target = $region84
      $region83: #{tpu_custom_call.1} parent=5 // pred_region
        %s876 = ssub.s32 %s24, 2
        // Predicated region
        $region85: #{tpu_custom_call.1} parent=83 // pred_check
          %p877 = pneg %p237
        $region86: #{tpu_custom_call.1} parent=83 // pred_check_branch
          %879 = sbr.rel (%p877) target = $region88
        $region87: #{tpu_custom_call.1} parent=83 // pred_region
          %s880 = sand.u32 %s222, 1
          %s881 = scalar_lea.sflag [#allocation6], %s880
          %s882 = sand.u32 %s222, 1
          %s883 = smul.addr %s882, 16
          %s884 = scalar_lea.vmem [#allocation12], %s883
          %885 = dma.done %s881, 256
        $region88: #{tpu_custom_call.1} parent=83 // pred_fallthru
          _
      $region84: #{tpu_custom_call.1} parent=5 // pred_fallthru
        _
    $region6: #{tpu_custom_call.1} parent=1 // loop_footer
      %s28 = sadd.s32 1, %s24
    $region7: #{tpu_custom_call.1} parent=1 // loop_footer_branch
      %23 = sbr.rel target = $region3
    $region8: #{tpu_custom_call.1} parent=1 // loop_exit
      _
    %886 = vsyncpa [#allocation5], 1
    %s887 = scalar_lea.sflag [#allocation5], 1
    %888 = vsyncpa %s887, 1
    %889 = vsyncpa [#allocation8], 1
    %s890 = scalar_lea.sflag [#allocation8], 1
    %891 = vsyncpa %s890, 1
    %892 = vsyncpa [#allocation11], 1
    %893 = vsyncpa [#allocation6], 1
    %s894 = scalar_lea.sflag [#allocation6], 1
    %895 = vsyncpa %s894, 1

</llo_original>
